<compile_context>
chip_gen: v7x
topology: tpu7x:2x2x1
jax: 0.10.0
libtpu: 0.0.40
codegen_flags: <defaults>
</compile_context>

<pallas_src>
import functools

import jax
import jax.numpy as jnp
from jax.experimental import pallas as pl
from jax.experimental.pallas import tpu as pltpu


def _diff_emb_kernel(ids_ref, table_ref, w_ref, b_ref, o_ref, *, emb_dim):
    # ids_ref  : (TB, 1)      int32  diffusion steps for this batch tile
    # table_ref: (T_pad, E)   f32    sinusoidal table (fully VMEM resident)
    # w_ref    : (E + P, P)   bf16   [W1; W2] concatenated along the input dim
    # b_ref    : (2, P)       f32    [b1; b2]
    # o_ref    : (TB, P)      f32
    tb = ids_ref.shape[0]
    t_pad = table_ref.shape[0]

    # Vectorized gather via one-hot matmul (exact: one-hot weights are 1.0/0.0,
    # accumulation in f32).  Replaces the serialized per-row SMEM/scratch loop.
    iota = jax.lax.broadcasted_iota(jnp.int32, (tb, t_pad), 1)
    onehot = (ids_ref[...] == iota).astype(jnp.float32)
    x = jnp.dot(onehot, table_ref[...], preferred_element_type=jnp.float32)

    # projection1 + SiLU.  bf16 x bf16 MXU matmul, f32 accumulation.
    w1 = w_ref[:emb_dim, :]
    h = jnp.dot(x.astype(jnp.bfloat16), w1,
                preferred_element_type=jnp.float32) + b_ref[0:1, :]
    h = h * (0.5 * (jnp.tanh(0.5 * h) + 1.0))          # SiLU: single EUP push

    # projection2 + ReLU.
    w2 = w_ref[emb_dim:, :]
    y = jnp.dot(h.astype(jnp.bfloat16), w2,
                preferred_element_type=jnp.float32) + b_ref[1:2, :]
    o_ref[...] = jnp.maximum(y, 0.0).astype(o_ref.dtype)


def diffusion_embedding_forward(ids, table, w, b, num_valid_steps):
    """ids: (B,) int diffusion steps. Returns (B, P) f32 projected embeddings."""
    B = ids.shape[0]
    # Bounds safety: clamp so no step can address past the valid table rows.
    ids = jnp.clip(ids.astype(jnp.int32), 0, num_valid_steps - 1)

    B_pad = max(8, ((B + 7) // 8) * 8)                  # full f32 sublane tiles
    if B_pad != B:
        ids = jnp.pad(ids, (0, B_pad - B))              # padded rows sliced off below

    # Batch tiling: tiny batches -> one tile; large batches -> 256-row tiles
    # (parallel grid axis => both TCs on v7x, taller LHS for the 256-wide MXU).
    if B_pad > 256:
        TB = 256
        B_full = ((B_pad + TB - 1) // TB) * TB
        if B_full != B_pad:
            ids = jnp.pad(ids, (0, B_full - B_pad))
            B_pad = B_full
    else:
        TB = B_pad
    ids2d = ids[:, None]                                # (B_pad, 1)

    T_pad, E = table.shape                              # T_pad is a multiple of 8
    P = w.shape[1]

    flops = (2 * B_pad * T_pad * E          # one-hot gather matmul
             + 2 * B_pad * E * P            # projection1
             + 2 * B_pad * P * P            # projection2
             + 8 * B_pad * P)               # bias / silu / relu elementwise
    bytes_accessed = (table.size * 4 + w.size * 2 + b.size * 4
                      + B_pad * 4 + B_pad * P * 4)

    out = pl.pallas_call(
        functools.partial(_diff_emb_kernel, emb_dim=E),
        out_shape=jax.ShapeDtypeStruct((B_pad, P), jnp.float32),
        grid_spec=pltpu.PrefetchScalarGridSpec(
            num_scalar_prefetch=0,
            grid=(B_pad // TB,),
            in_specs=[
                pl.BlockSpec((TB, 1), lambda i: (i, 0)),        # diffusion-step ids
                pl.BlockSpec((T_pad, E), lambda i: (0, 0)),     # sinusoidal table (f32)
                pl.BlockSpec((E + P, P), lambda i: (0, 0)),     # [W1; W2] (bf16)
                pl.BlockSpec((2, P), lambda i: (0, 0)),         # [b1; b2] (f32)
            ],
            out_specs=pl.BlockSpec((TB, P), lambda i: (i, 0)),
        ),
        compiler_params=pltpu.CompilerParams(
            dimension_semantics=("parallel",)),
        cost_estimate=pl.CostEstimate(
            flops=flops,
            transcendentals=B_pad * P,
            bytes_accessed=bytes_accessed),
    )(ids2d, table, w, b)
    return out[:B]


def build_embedding_table(num_steps, half_dim):
    """Sinusoidal table of shape (num_steps, 2*half_dim), as in CSDI."""
    steps = jnp.arange(num_steps, dtype=jnp.float32)[:, None]             # (T, 1)
    freqs = 10.0 ** (jnp.arange(half_dim, dtype=jnp.float32)
                     / (half_dim - 1) * 4.0)[None, :]                     # (1, D/2)
    table = steps * freqs
    return jnp.concatenate([jnp.sin(table), jnp.cos(table)], axis=1)      # (T, D)


class DiffusionEmbeddingPallas:
    def __init__(self, num_steps, embedding_dim=128, projection_dim=None, key=None):
        if projection_dim is None:
            projection_dim = embedding_dim
        self.num_steps = num_steps

        table = build_embedding_table(num_steps, embedding_dim // 2)
        # Pad the step axis to a multiple of 8 so the VMEM tile is sublane-clean.
        t_pad = ((num_steps + 7) // 8) * 8
        if t_pad != num_steps:
            table = jnp.pad(table, ((0, t_pad - num_steps), (0, 0)))
        self.embedding = table                                            # (T_pad, E)

        if key is None:
            key = jax.random.PRNGKey(0)
        k1, k2, k3, k4 = jax.random.split(key, 4)
        # Deterministic init mimicking nn.Linear's U(-1/sqrt(fan_in), 1/sqrt(fan_in)).
        bnd1 = 1.0 / (embedding_dim ** 0.5)
        bnd2 = 1.0 / (projection_dim ** 0.5)
        w1 = jax.random.uniform(k1, (embedding_dim, projection_dim),
                                jnp.float32, -bnd1, bnd1)
        w2 = jax.random.uniform(k3, (projection_dim, projection_dim),
                                jnp.float32, -bnd2, bnd2)
        b1 = jax.random.uniform(k2, (1, projection_dim), jnp.float32, -bnd1, bnd1)
        b2 = jax.random.uniform(k4, (1, projection_dim), jnp.float32, -bnd2, bnd2)
        # Consolidated tensors: one bf16 weight slab, one f32 bias slab (fewer DMAs).
        self.w = jnp.concatenate([w1, w2], axis=0).astype(jnp.bfloat16)   # (E+P, P)
        self.b = jnp.concatenate([b1, b2], axis=0)                        # (2, P)

    def __call__(self, diffusion_step):
        ids = jnp.asarray(diffusion_step, dtype=jnp.int32)
        squeeze = ids.ndim == 0
        if squeeze:                                  # scalar step -> (1,)
            ids = ids[None]
        out = diffusion_embedding_forward(ids, self.embedding,
                                          self.w, self.b, self.num_steps)
        return out[0] if squeeze else out


def _reference_forward(module, diffusion_step):
    """Pure-JAX f32 reference of the PyTorch forward (same bf16-stored weights)."""
    ids = jnp.asarray(diffusion_step, dtype=jnp.int32)
    x = module.embedding[ids]
    E = module.embedding.shape[1]
    w1 = module.w[:E, :].astype(jnp.float32)
    w2 = module.w[E:, :].astype(jnp.float32)
    x = x @ w1 + module.b[0]
    x = x * jax.nn.sigmoid(x)
    x = x @ w2 + module.b[1]
    return jnp.maximum(x, 0.0)


if __name__ == "__main__":
    num_steps = 50           # T = 50
    embedding_dim = 128
    module = DiffusionEmbeddingPallas(num_steps, embedding_dim,
                                      key=jax.random.PRNGKey(0))

    # Tolerance: kernel runs the two projections with bf16 activations/weights
    # (f32 accumulation); reference is f32 -> allow ~1e-2 level differences.
    ATOL = RTOL = 2e-2

    # Batch of diffusion steps (integers in [0, T)) — multiple-of-8 batch.
    diffusion_step = jnp.array([0, 1, 7, 13, 25, 31, 42, 49], dtype=jnp.int32)
    out = jax.block_until_ready(module(diffusion_step))
    ref = _reference_forward(module, diffusion_step)
    assert out.shape == (diffusion_step.shape[0], embedding_dim), out.shape
    assert jnp.allclose(out, ref, atol=ATOL, rtol=RTOL), "mismatch vs reference (B=8)"

    # Non-multiple-of-8 batch exercises the pad/slice path.
    ds5 = jnp.array([2, 3, 11, 29, 48], dtype=jnp.int32)
    out5 = jax.block_until_ready(module(ds5))
    ref5 = _reference_forward(module, ds5)
    assert out5.shape == (5, embedding_dim), out5.shape
    assert jnp.allclose(out5, ref5, atol=ATOL, rtol=RTOL), "mismatch vs reference (B=5)"

    # Scalar diffusion step (matches the PyTorch single-step usage).
    out1 = jax.block_until_ready(module(17))
    ref1 = _reference_forward(module, 17)
    assert out1.shape == (embedding_dim,), out1.shape
    assert jnp.allclose(out1, ref1, atol=ATOL, rtol=RTOL), "mismatch vs reference (scalar)"

    print("KERNEL_OK")
</pallas_src>

<mosaic_0001>
module attributes {stable_mosaic.version = 11 : i64} {
  func.func @_diff_emb_kernel(%arg0: i32, %arg1: memref<8x1xi32, #tpu.memory_space<vmem>>, %arg2: memref<56x128xf32, #tpu.memory_space<vmem>>, %arg3: memref<256x128xbf16, #tpu.memory_space<vmem>>, %arg4: memref<2x128xf32, #tpu.memory_space<vmem>>, %arg5: memref<8x128xf32, #tpu.memory_space<vmem>>) attributes {dimension_semantics = [#tpu.dimension_semantics<parallel>], iteration_bounds = array<i64: 1>, scalar_prefetch = 0 : i64, scratch_operands = 0 : i64, tpu.core_type = #tpu.core_type<tc>, window_params = [{transform_indices = @transform_0, window_bounds = array<i64: 8, 1>}, {pipeline_mode = #tpu.pipeline_mode<synchronous>, transform_indices = @transform_1, window_bounds = array<i64: 56, 128>}, {pipeline_mode = #tpu.pipeline_mode<synchronous>, transform_indices = @transform_2, window_bounds = array<i64: 256, 128>}, {pipeline_mode = #tpu.pipeline_mode<synchronous>, transform_indices = @transform_3, window_bounds = array<i64: 2, 128>}, {transform_indices = @transform_4, window_bounds = array<i64: 8, 128>}]} {
    %0 = tpu.iota {dimensions = array<i32: 1>} : vector<8x56xi32>
    %c0 = arith.constant 0 : index
    %c0_0 = arith.constant 0 : index
    %1 = vector.load %arg1[%c0, %c0_0] : memref<8x1xi32, #tpu.memory_space<vmem>>, vector<8x1xi32>
    %2 = vector.broadcast %1 : vector<8x1xi32> to vector<8x56xi32>
    %3 = arith.cmpi eq, %2, %0 : vector<8x56xi32>
    %4 = arith.extui %3 : vector<8x56xi1> to vector<8x56xi32>
    %5 = arith.sitofp %4 : vector<8x56xi32> to vector<8x56xf32>
    %c0_1 = arith.constant 0 : index
    %c0_2 = arith.constant 0 : index
    %6 = vector.load %arg2[%c0_1, %c0_2] : memref<56x128xf32, #tpu.memory_space<vmem>>, vector<56x128xf32>
    %cst = arith.constant dense<0.000000e+00> : vector<8x128xf32>
    %7 = tpu.matmul %5, %6, %cst {dimension_numbers = #tpu.dot_dimension_numbers<[1], [0], [0], [1], [0, 0, 1, 1], [], []>} : vector<8x56xf32>, vector<56x128xf32>, vector<8x128xf32> -> vector<8x128xf32>
    %c0_3 = arith.constant 0 : index
    %c0_4 = arith.constant 0 : index
    %8 = vector.load %arg3[%c0_3, %c0_4] : memref<256x128xbf16, #tpu.memory_space<vmem>>, vector<128x128xbf16>
    %9 = arith.truncf %7 : vector<8x128xf32> to vector<8x128xbf16>
    %cst_5 = arith.constant dense<0.000000e+00> : vector<8x128xf32>
    %10 = tpu.matmul %9, %8, %cst_5 {dimension_numbers = #tpu.dot_dimension_numbers<[1], [0], [0], [1], [0, 0, 1, 1], [], []>} : vector<8x128xbf16>, vector<128x128xbf16>, vector<8x128xf32> -> vector<8x128xf32>
    %c0_6 = arith.constant 0 : index
    %c0_7 = arith.constant 0 : index
    %11 = vector.load %arg4[%c0_6, %c0_7] : memref<2x128xf32, #tpu.memory_space<vmem>>, vector<1x128xf32>
    %12 = vector.broadcast %11 : vector<1x128xf32> to vector<8x128xf32>
    %13 = arith.addf %10, %12 : vector<8x128xf32>
    %cst_8 = arith.constant 5.000000e-01 : f32
    %14 = vector.broadcast %cst_8 : f32 to vector<8x128xf32>
    %15 = arith.mulf %14, %13 : vector<8x128xf32>
    %16 = math.tanh %15 : vector<8x128xf32>
    %cst_9 = arith.constant 1.000000e+00 : f32
    %17 = vector.broadcast %cst_9 : f32 to vector<8x128xf32>
    %18 = arith.addf %16, %17 : vector<8x128xf32>
    %cst_10 = arith.constant 5.000000e-01 : f32
    %19 = vector.broadcast %cst_10 : f32 to vector<8x128xf32>
    %20 = arith.mulf %19, %18 : vector<8x128xf32>
    %21 = arith.mulf %13, %20 : vector<8x128xf32>
    %c128 = arith.constant 128 : index
    %c0_11 = arith.constant 0 : index
    %22 = vector.load %arg3[%c128, %c0_11] : memref<256x128xbf16, #tpu.memory_space<vmem>>, vector<128x128xbf16>
    %23 = arith.truncf %21 : vector<8x128xf32> to vector<8x128xbf16>
    %cst_12 = arith.constant dense<0.000000e+00> : vector<8x128xf32>
    %24 = tpu.matmul %23, %22, %cst_12 {dimension_numbers = #tpu.dot_dimension_numbers<[1], [0], [0], [1], [0, 0, 1, 1], [], []>} : vector<8x128xbf16>, vector<128x128xbf16>, vector<8x128xf32> -> vector<8x128xf32>
    %c1 = arith.constant 1 : index
    %c0_13 = arith.constant 0 : index
    %25 = vector.load %arg4[%c1, %c0_13] : memref<2x128xf32, #tpu.memory_space<vmem>>, vector<1x128xf32>
    %26 = vector.broadcast %25 : vector<1x128xf32> to vector<8x128xf32>
    %27 = arith.addf %24, %26 : vector<8x128xf32>
    %cst_14 = arith.constant 0.000000e+00 : f32
    %28 = vector.broadcast %cst_14 : f32 to vector<8x128xf32>
    %29 = arith.maximumf %27, %28 : vector<8x128xf32>
    %c0_15 = arith.constant 0 : index
    %c0_16 = arith.constant 0 : index
    %30 = vector.load %arg5[%c0_15, %c0_16] : memref<8x128xf32, #tpu.memory_space<vmem>>, vector<8x128xf32>
    tpu.vector_store %arg5[%c0_15, %c0_16], %29 {strides = array<i32>} : memref<8x128xf32, #tpu.memory_space<vmem>>, vector<8x128xf32>,
    return
  }
  func.func @transform_0(%arg0: i32) -> (i32, i32) {
    %c0_i32 = arith.constant 0 : i32
    %c0_i32_0 = arith.constant 0 : i32
    return %arg0, %c0_i32 : i32, i32
  }
  func.func @transform_1(%arg0: i32) -> (i32, i32) {
    %c0_i32 = arith.constant 0 : i32
    %c0_i32_0 = arith.constant 0 : i32
    %c0_i32_1 = arith.constant 0 : i32
    return %c0_i32, %c0_i32_0 : i32, i32
  }
  func.func @transform_2(%arg0: i32) -> (i32, i32) {
    %c0_i32 = arith.constant 0 : i32
    %c0_i32_0 = arith.constant 0 : i32
    %c0_i32_1 = arith.constant 0 : i32
    return %c0_i32, %c0_i32_0 : i32, i32
  }
  func.func @transform_3(%arg0: i32) -> (i32, i32) {
    %c0_i32 = arith.constant 0 : i32
    %c0_i32_0 = arith.constant 0 : i32
    %c0_i32_1 = arith.constant 0 : i32
    return %c0_i32, %c0_i32_0 : i32, i32
  }
  func.func @transform_4(%arg0: i32) -> (i32, i32) {
    %c0_i32 = arith.constant 0 : i32
    %c0_i32_0 = arith.constant 0 : i32
    return %arg0, %c0_i32 : i32, i32
  }
}

</mosaic_0001>

<llo_original>
// kernel: tpu_custom_call.1
$region0: #{tpu_custom_call.1}
  #allocation0 [shape = 'u32[]', space=smem, size = 0x4, offset = 0x4, fixed_abs, tag = 'smem constant byte address 0x4 - core index']
  #allocation1 [shape = 'u32[144,128]{1,0:T(1,128)}', space=vmem, size = 0x12000, scoped, tag = 'internal scratch']
  %s0 = inlined_call_operand.vmem [shape: s32[8,1], index: 0, kind: input, shape index: {}]
  %s1 = inlined_call_operand.hbm [shape: f32[56,128], index: 1, kind: input, shape index: {}]
  %s2 = inlined_call_operand.hbm [shape: bf16[256,128], index: 2, kind: input, shape index: {}]
  %s3 = inlined_call_operand.vmem [shape: f32[2,128], index: 3, kind: input, shape index: {}]
  %s4 = inlined_call_operand.hbm [shape: f32[8,128], index: 4, kind: output, shape index: {}]
  %s5 = sld [smem:[#allocation0]]
  $region34: #{tpu_custom_call.1} parent=0
    _
  %s7 = ssub.s32 1, %s5
  %s8 = scalar_select 0, %s7, %s5
  $region1: #{tpu_custom_call.1} parent=0
    #allocation2 [shape = 'u8[28672]{0}', space=vmem, size = 0x7000, scoped, tag = 'input window, operand 1, single buffered']
    #allocation3 [shape = 's32[1]{0}', space=sflag, size = 0x4, scoped, tag = 'scoped memory for tpu_custom_call.1']
    #allocation4 [shape = 's32[1]{0}', space=sflag, size = 0x4, scoped, tag = 'scoped memory for tpu_custom_call.1']
    #allocation5 [shape = 'u8[65536]{0}', space=vmem, size = 0x10000, scoped, tag = 'input window, operand 2, single buffered']
    #allocation6 [shape = 's32[1]{0}', space=sflag, size = 0x4, scoped, tag = 'scoped memory for tpu_custom_call.1']
    #allocation7 [shape = 'u8[4096]{0}', space=vmem, size = 0x1000, scoped, tag = 'output window, operand 0, single buffered']
    %9 = vsyncpa [#allocation3], 0
    %10 = vsyncpa [#allocation6], 0
    %11 = vsyncpa [#allocation4], 0
    // Predicated region
    $region2: #{tpu_custom_call.1} parent=1 // pred_check
      _
    $region3: #{tpu_custom_call.1} parent=1 // pred_check_branch
      %13 = sbr.rel (0) target = $region5
    $region4: #{tpu_custom_call.1} parent=1 // pred_region
      _
    $region5: #{tpu_custom_call.1} parent=1 // pred_fallthru
      _
    // Predicated region
    $region6: #{tpu_custom_call.1} parent=1 // pred_check
      _
    $region7: #{tpu_custom_call.1} parent=1 // pred_check_branch
      %15 = sbr.rel (0) target = $region9
    $region8: #{tpu_custom_call.1} parent=1 // pred_region
      %s17 = ssub.s32 896, 896
      %18 = vsyncadd [#allocation3], %s17
      %s19 = sshll.u32 [#allocation2], 4
      %s20 = int_to_ptr.vmem [resolvable:$true] %s19
      %25 = dma.hbm_to_vmem [thread:$0]  %s1, 896, %s20, [#allocation3], 128, 128, 8
    $region9: #{tpu_custom_call.1} parent=1 // pred_fallthru
      _
    // Predicated region
    $region10: #{tpu_custom_call.1} parent=1 // pred_check
      _
    $region11: #{tpu_custom_call.1} parent=1 // pred_check_branch
      %27 = sbr.rel (0) target = $region13
    $region12: #{tpu_custom_call.1} parent=1 // pred_region
      %s29 = ssub.s32 2048, 2048
      %30 = vsyncadd [#allocation6], %s29
      %s31 = sshll.u32 [#allocation5], 4
      %s32 = int_to_ptr.vmem [resolvable:$true] %s31
      %37 = dma.hbm_to_vmem [thread:$0]  %s2, 2048, %s32, [#allocation6], 64, 64, 4
    $region13: #{tpu_custom_call.1} parent=1 // pred_fallthru
      _
    // Predicated region
    $region14: #{tpu_custom_call.1} parent=1 // pred_check
      _
    $region15: #{tpu_custom_call.1} parent=1 // pred_check_branch
      %39 = sbr.rel (0) target = $region17
    $region16: #{tpu_custom_call.1} parent=1 // pred_region
      _
    $region17: #{tpu_custom_call.1} parent=1 // pred_fallthru
      _
    // Predicated region
    $region18: #{tpu_custom_call.1} parent=1 // pred_check
      _
    $region19: #{tpu_custom_call.1} parent=1 // pred_check_branch
      %41 = sbr.rel (0) target = $region21
    $region20: #{tpu_custom_call.1} parent=1 // pred_region
      %42 = dma.done [#allocation3], 896
    $region21: #{tpu_custom_call.1} parent=1 // pred_fallthru
      _
    // Predicated region
    $region22: #{tpu_custom_call.1} parent=1 // pred_check
      _
    $region23: #{tpu_custom_call.1} parent=1 // pred_check_branch
      %44 = sbr.rel (0) target = $region25
    $region24: #{tpu_custom_call.1} parent=1 // pred_region
      %45 = dma.done [#allocation6], 2048
    $region25: #{tpu_custom_call.1} parent=1 // pred_fallthru
      _
    %v47 = vlaneseq
    %v48 = vand.u32 %v47, 127
    %v49 = vld [vmem:[%s0] sm:$0xff]
    %50 = vset.pattern.permute.xlu0 0
    %51 = vperm.xlu0 %50, %v49
    %v52 = vpop.permute.xlu0 %51
    %vm53 = vcmp.eq.s32.totalorder %v52, %v48
    %v54 = vsel %vm53, 1, 0
    %v55 = vcvt.s32.f32 %v54
    %v56 = vld [vmem:[#allocation2] sm:$0xff]
    %v57 = vld [vmem:[#allocation2 + $0x8] sm:$0xff]
    %v58 = vld [vmem:[#allocation2 + $0x10] sm:$0xff]
    %v59 = vld [vmem:[#allocation2 + $0x18] sm:$0xff]
    %v60 = vld [vmem:[#allocation2 + $0x20] sm:$0xff]
    %v61 = vld [vmem:[#allocation2 + $0x28] sm:$0xff]
    %v62 = vld [vmem:[#allocation2 + $0x30] sm:$0xff]
    %vm63 = vcmask 457728
    %v65 = vsel %vm63, %v55, 0
    %67 = vmatprep.subr.mxu0 0.0
    %68 = vmatpush1.msra.mxu0 %v56
    %69 = vmatprep.subr.mxu0 0.0
    %70 = vmatpush1.msra.mxu0 %v57
    %71 = vmatprep.subr.mxu0 0.0
    %72 = vmatpush1.msra.mxu0 %v58
    %73 = vmatprep.subr.mxu0 0.0
    %74 = vmatpush1.msra.mxu0 %v59
    %75 = vmatprep.subr.mxu0 0.0
    %76 = vmatpush1.msra.mxu0 %v60
    %77 = vmatprep.subr.mxu0 0.0
    %78 = vmatpush1.msra.mxu0 %v61
    %79 = vmatprep.subr.mxu0 0.0
    %80 = vmatpush1.msra.mxu0 %v62
    %81 = vmatprep.subr.mxu0 0.0
    %82 = vmatpush1.msra.mxu0 0.0
    %83 = vmatprep.subr.mxu0 0.0
    %84 = vmatpush1.msra.mxu0 0.0
    %85 = vmatprep.subr.mxu0 0.0
    %86 = vmatpush1.msra.mxu0 0.0
    %87 = vmatprep.subr.mxu0 0.0
    %88 = vmatpush1.msra.mxu0 0.0
    %89 = vmatprep.subr.mxu0 0.0
    %90 = vmatpush1.msra.mxu0 0.0
    %91 = vmatprep.subr.mxu0 0.0
    %92 = vmatpush1.msra.mxu0 0.0
    %93 = vmatprep.subr.mxu0 0.0
    %94 = vmatpush1.msra.mxu0 0.0
    %95 = vmatprep.subr.mxu0 0.0
    %96 = vmatpush1.msra.mxu0 0.0
    %97 = vmatprep.subr.mxu0 0.0
    %98 = vmatpush1.msra.mxu0 0.0
    %99 = vmatprep.subr.mxu0 0.0
    %100 = vmatpush1.msra.mxu0 0.0
    %101 = vmatprep.subr.mxu0 0.0
    %102 = vmatpush1.msra.mxu0 0.0
    %103 = vmatprep.subr.mxu0 0.0
    %104 = vmatpush1.msra.mxu0 0.0
    %105 = vmatprep.subr.mxu0 0.0
    %106 = vmatpush1.msra.mxu0 0.0
    %107 = vmatprep.subr.mxu0 0.0
    %108 = vmatpush1.msra.mxu0 0.0
    %109 = vmatprep.subr.mxu0 0.0
    %110 = vmatpush1.msra.mxu0 0.0
    %111 = vmatprep.subr.mxu0 0.0
    %112 = vmatpush1.msra.mxu0 0.0
    %113 = vmatprep.subr.mxu0 0.0
    %114 = vmatpush1.msra.mxu0 0.0
    %115 = vmatprep.subr.mxu0 0.0
    %116 = vmatpush1.msra.mxu0 0.0
    %117 = vmatprep.subr.mxu0 0.0
    %118 = vmatpush1.msra.mxu0 0.0
    %119 = vmatprep.subr.mxu0 0.0
    %120 = vmatpush1.msra.mxu0 0.0
    %121 = vmatprep.subr.mxu0 0.0
    %122 = vmatpush1.msra.mxu0 0.0
    %123 = vmatprep.subr.mxu0 0.0
    %124 = vmatpush1.msra.mxu0 0.0
    %125 = vmatprep.subr.mxu0 0.0
    %126 = vmatpush1.msra.mxu0 0.0
    %127 = vmatprep.subr.mxu0 0.0
    %128 = vmatpush1.msra.mxu0 0.0
    %129 = vmatprep.subr.mxu0 0.0
    %130 = vmatpush1.msra.mxu0 0.0
    %131 = vmatprep.mubr.f32.mxu0 0.0
    %132 = vmatmul.mubr.f32.gmra.mrb[0].mxu0 %v65
    %v133 = vpop.f32.mrb[0].mxu0
    %v134 = vadd.f32 0.0, %v133
    %v135 = vpop.f32.mrb[0].mxu0
    %136 = vdwg.mxu0
    %v137 = vld [vmem:[#allocation5] sm:$0xf]
    %v138 = vld [vmem:[#allocation5 + $0x4] sm:$0xf]
    %v139 = vld [vmem:[#allocation5 + $0x8] sm:$0xf]
    %v140 = vld [vmem:[#allocation5 + $0xc] sm:$0xf]
    %v141 = vld [vmem:[#allocation5 + $0x10] sm:$0xf]
    %v142 = vld [vmem:[#allocation5 + $0x14] sm:$0xf]
    %v143 = vld [vmem:[#allocation5 + $0x18] sm:$0xf]
    %v144 = vld [vmem:[#allocation5 + $0x1c] sm:$0xf]
    %v145 = vld [vmem:[#allocation5 + $0x20] sm:$0xf]
    %v146 = vld [vmem:[#allocation5 + $0x24] sm:$0xf]
    %v147 = vld [vmem:[#allocation5 + $0x28] sm:$0xf]
    %v148 = vld [vmem:[#allocation5 + $0x2c] sm:$0xf]
    %v149 = vld [vmem:[#allocation5 + $0x30] sm:$0xf]
    %v150 = vld [vmem:[#allocation5 + $0x34] sm:$0xf]
    %v151 = vld [vmem:[#allocation5 + $0x38] sm:$0xf]
    %v152 = vld [vmem:[#allocation5 + $0x3c] sm:$0xf]
    %v153 = vpack.c.bf16 %v134, %v134
    %v154 = vld [vmem:[%s3] sm:$0x1]
    %v155 = vlaneseq
    %v156 = vshrl.u32 %v155, 7
    %v157 = vsub.s32 0, %v156
    %v158 = vrot.slane %v154, %v157
    %v175 = vunpack.c.l.b16 %v137
    %v176 = vunpack.c.l.b16 %v138
    %v177 = vunpack.c.l.b16 %v139
    %v178 = vunpack.c.l.b16 %v140
    %v179 = vunpack.c.l.b16 %v141
    %v180 = vunpack.c.l.b16 %v142
    %v181 = vunpack.c.l.b16 %v143
    %v182 = vunpack.c.l.b16 %v144
    %v183 = vunpack.c.l.b16 %v145
    %v184 = vunpack.c.l.b16 %v146
    %v185 = vunpack.c.l.b16 %v147
    %v186 = vunpack.c.l.b16 %v148
    %v187 = vunpack.c.l.b16 %v149
    %v188 = vunpack.c.l.b16 %v150
    %v189 = vunpack.c.l.b16 %v151
    %v190 = vunpack.c.l.b16 %v152
    %v191 = vpack.c.b16 %v176, %v175
    %v192 = vpack.c.b16 %v178, %v177
    %v193 = vpack.c.b16 %v180, %v179
    %v194 = vpack.c.b16 %v182, %v181
    %v195 = vpack.c.b16 %v184, %v183
    %v196 = vpack.c.b16 %v186, %v185
    %v197 = vpack.c.b16 %v188, %v187
    %v198 = vpack.c.b16 %v190, %v189
    %207 = vmatprep.subr.bf16.mxu0 0
    %208 = vmatpush1.bf16.msra.mxu0 %v191
    %209 = vmatprep.subr.bf16.mxu0 0
    %210 = vmatpush1.bf16.msra.mxu0 %v192
    %211 = vmatprep.subr.bf16.mxu0 0
    %212 = vmatpush1.bf16.msra.mxu0 %v193
    %213 = vmatprep.subr.bf16.mxu0 0
    %214 = vmatpush1.bf16.msra.mxu0 %v194
    %215 = vmatprep.subr.bf16.mxu0 0
    %216 = vmatpush1.bf16.msra.mxu0 %v195
    %217 = vmatprep.subr.bf16.mxu0 0
    %218 = vmatpush1.bf16.msra.mxu0 %v196
    %219 = vmatprep.subr.bf16.mxu0 0
    %220 = vmatpush1.bf16.msra.mxu0 %v197
    %221 = vmatprep.subr.bf16.mxu0 0
    %222 = vmatpush1.bf16.msra.mxu0 %v198
    %223 = vmatprep.subr.bf16.mxu0 0
    %224 = vmatpush1.bf16.msra.mxu0 0
    %225 = vmatprep.subr.bf16.mxu0 0
    %226 = vmatpush1.bf16.msra.mxu0 0
    %227 = vmatprep.subr.bf16.mxu0 0
    %228 = vmatpush1.bf16.msra.mxu0 0
    %229 = vmatprep.subr.bf16.mxu0 0
    %230 = vmatpush1.bf16.msra.mxu0 0
    %231 = vmatprep.subr.bf16.mxu0 0
    %232 = vmatpush1.bf16.msra.mxu0 0
    %233 = vmatprep.subr.bf16.mxu0 0
    %234 = vmatpush1.bf16.msra.mxu0 0
    %235 = vmatprep.subr.bf16.mxu0 0
    %236 = vmatpush1.bf16.msra.mxu0 0
    %237 = vmatprep.subr.bf16.mxu0 0
    %238 = vmatpush1.bf16.msra.mxu0 0
    %239 = vmatprep.mubr.bf16.mxu0 0
    %240 = vmatmul.mubr.bf16.gmra.mrb[0].mxu0 %v153
    %v241 = vpop.f32.mrb[0].mxu0
    %v242 = vadd.f32 %v158, %v241
    %v243 = vpop.f32.mrb[0].mxu0
    %v244 = vpop.f32.mrb[0].mxu0
    %v245 = vpop.f32.mrb[0].mxu0
    %246 = vdwg.mxu0
    %v247 = vmul.f32 %v242, 0.5
    %v248 = vtanh.pop %v247
    %v249 = vadd.f32 %v248, 1.0
    %v250 = vmul.f32 %v249, 0.5
    %v251 = vmul.f32 %v242, %v250
    %v252 = vld [vmem:[#allocation5 + $0x40] sm:$0xf]
    %v253 = vld [vmem:[#allocation5 + $0x44] sm:$0xf]
    %v254 = vld [vmem:[#allocation5 + $0x48] sm:$0xf]
    %v255 = vld [vmem:[#allocation5 + $0x4c] sm:$0xf]
    %v256 = vld [vmem:[#allocation5 + $0x50] sm:$0xf]
    %v257 = vld [vmem:[#allocation5 + $0x54] sm:$0xf]
    %v258 = vld [vmem:[#allocation5 + $0x58] sm:$0xf]
    %v259 = vld [vmem:[#allocation5 + $0x5c] sm:$0xf]
    %v260 = vld [vmem:[#allocation5 + $0x60] sm:$0xf]
    %v261 = vld [vmem:[#allocation5 + $0x64] sm:$0xf]
    %v262 = vld [vmem:[#allocation5 + $0x68] sm:$0xf]
    %v263 = vld [vmem:[#allocation5 + $0x6c] sm:$0xf]
    %v264 = vld [vmem:[#allocation5 + $0x70] sm:$0xf]
    %v265 = vld [vmem:[#allocation5 + $0x74] sm:$0xf]
    %v266 = vld [vmem:[#allocation5 + $0x78] sm:$0xf]
    %v267 = vld [vmem:[#allocation5 + $0x7c] sm:$0xf]
    %v268 = vpack.c.bf16 %v251, %v251
    %v269 = vld [vmem:[%s3 + $0x1] sm:$0x1]
    %v270 = vlaneseq
    %v271 = vshrl.u32 %v270, 7
    %v272 = vsub.s32 0, %v271
    %v273 = vrot.slane %v269, %v272
    %v290 = vunpack.c.l.b16 %v252
    %v291 = vunpack.c.l.b16 %v253
    %v292 = vunpack.c.l.b16 %v254
    %v293 = vunpack.c.l.b16 %v255
    %v294 = vunpack.c.l.b16 %v256
    %v295 = vunpack.c.l.b16 %v257
    %v296 = vunpack.c.l.b16 %v258
    %v297 = vunpack.c.l.b16 %v259
    %v298 = vunpack.c.l.b16 %v260
    %v299 = vunpack.c.l.b16 %v261
    %v300 = vunpack.c.l.b16 %v262
    %v301 = vunpack.c.l.b16 %v263
    %v302 = vunpack.c.l.b16 %v264
    %v303 = vunpack.c.l.b16 %v265
    %v304 = vunpack.c.l.b16 %v266
    %v305 = vunpack.c.l.b16 %v267
    %v306 = vpack.c.b16 %v291, %v290
    %v307 = vpack.c.b16 %v293, %v292
    %v308 = vpack.c.b16 %v295, %v294
    %v309 = vpack.c.b16 %v297, %v296
    %v310 = vpack.c.b16 %v299, %v298
    %v311 = vpack.c.b16 %v301, %v300
    %v312 = vpack.c.b16 %v303, %v302
    %v313 = vpack.c.b16 %v305, %v304
    %322 = vmatprep.subr.bf16.mxu0 0
    %323 = vmatpush1.bf16.msra.mxu0 %v306
    %324 = vmatprep.subr.bf16.mxu0 0
    %325 = vmatpush1.bf16.msra.mxu0 %v307
    %326 = vmatprep.subr.bf16.mxu0 0
    %327 = vmatpush1.bf16.msra.mxu0 %v308
    %328 = vmatprep.subr.bf16.mxu0 0
    %329 = vmatpush1.bf16.msra.mxu0 %v309
    %330 = vmatprep.subr.bf16.mxu0 0
    %331 = vmatpush1.bf16.msra.mxu0 %v310
    %332 = vmatprep.subr.bf16.mxu0 0
    %333 = vmatpush1.bf16.msra.mxu0 %v311
    %334 = vmatprep.subr.bf16.mxu0 0
    %335 = vmatpush1.bf16.msra.mxu0 %v312
    %336 = vmatprep.subr.bf16.mxu0 0
    %337 = vmatpush1.bf16.msra.mxu0 %v313
    %338 = vmatprep.subr.bf16.mxu0 0
    %339 = vmatpush1.bf16.msra.mxu0 0
    %340 = vmatprep.subr.bf16.mxu0 0
    %341 = vmatpush1.bf16.msra.mxu0 0
    %342 = vmatprep.subr.bf16.mxu0 0
    %343 = vmatpush1.bf16.msra.mxu0 0
    %344 = vmatprep.subr.bf16.mxu0 0
    %345 = vmatpush1.bf16.msra.mxu0 0
    %346 = vmatprep.subr.bf16.mxu0 0
    %347 = vmatpush1.bf16.msra.mxu0 0
    %348 = vmatprep.subr.bf16.mxu0 0
    %349 = vmatpush1.bf16.msra.mxu0 0
    %350 = vmatprep.subr.bf16.mxu0 0
    %351 = vmatpush1.bf16.msra.mxu0 0
    %352 = vmatprep.subr.bf16.mxu0 0
    %353 = vmatpush1.bf16.msra.mxu0 0
    %354 = vmatprep.mubr.bf16.mxu0 0
    %355 = vmatmul.mubr.bf16.gmra.mrb[0].mxu0 %v268
    %v356 = vpop.f32.mrb[0].mxu0
    %v357 = vadd.f32 %v273, %v356
    %v358 = vpop.f32.mrb[0].mxu0
    %v359 = vpop.f32.mrb[0].mxu0
    %v360 = vpop.f32.mrb[0].mxu0
    %361 = vdwg.mxu0
    %v362 = vmax.f32 %v357, 0.0
    %363 = vst [vmem:[#allocation7] sm:$0xff] %v362
    // Predicated region
    $region26: #{tpu_custom_call.1} parent=1 // pred_check
      _
    $region27: #{tpu_custom_call.1} parent=1 // pred_check_branch
      %365 = sbr.rel (0) target = $region29
    $region28: #{tpu_custom_call.1} parent=1 // pred_region
      %s367 = ssub.s32 128, 128
      %368 = vsyncadd [#allocation4], %s367
      %s370 = sshll.u32 [#allocation7], 4
      %s371 = int_to_ptr.vmem [resolvable:$true] %s370
      %373 = dma.vmem_to_hbm [thread:$0]  %s371, 128, %s4, [#allocation4]
    $region29: #{tpu_custom_call.1} parent=1 // pred_fallthru
      _
    // Predicated region
    $region30: #{tpu_custom_call.1} parent=1 // pred_check
      _
    $region31: #{tpu_custom_call.1} parent=1 // pred_check_branch
      %375 = sbr.rel (0) target = $region33
    $region32: #{tpu_custom_call.1} parent=1 // pred_region
      %376 = dma.done [#allocation4], 128
    $region33: #{tpu_custom_call.1} parent=1 // pred_fallthru
      _
    %377 = vsyncpa [#allocation3], 1
    %378 = vsyncpa [#allocation6], 1
    %379 = vsyncpa [#allocation4], 1

</llo_original>
